<compile_context>
chip_gen: v7x
topology: tpu7x:2x2x1
jax: 0.10.0
libtpu: 0.0.40
codegen_flags: <defaults>
</compile_context>

<pallas_src>
import jax
import jax.numpy as jnp
import numpy as np
from jax.experimental import pallas as pl
from jax.experimental.pallas import tpu as pltpu

# --- synthetic config ---------------------------------------------------------
NUM_CLASSES = 4                 # config.num_classes  (> 1 -> CrossEntropyLoss path)
BATCH = 8                       # number of graphs in the batch
HAS_AUX_INPUT = True            # config.has_aux_input
INTERMEDIATE_LOSS_WEIGHT = 0.2  # config.intermediate_loss_weight
IGNORE_INDEX = -1               # CrossEntropyLoss(ignore_index=-1)


# --- Pallas kernel ------------------------------------------------------------
def _make_loss_kernel(has_aux: bool, weight: float):
    """Build a kernel closure; config flags/weights are compile-time constants."""

    def kernel(logits_ref, tgt_ref, out_ref):
        # logits_ref: (G, N, C)  stacked main/aux logits (G == 2 iff has_aux)
        # tgt_ref:    (N, 1)     int32 targets (IGNORE_INDEX rows are masked)
        # out_ref:    (1, 1)     f32 scalar in SMEM
        g, n, c = logits_ref.shape

        tgt = tgt_ref[...]                                   # (N, 1) int32
        valid = tgt != IGNORE_INDEX                          # (N, 1) bool
        cnt = jnp.sum(valid.astype(jnp.float32))             # scalar

        # one-hot gather mask for the target class of each row
        col = jax.lax.broadcasted_iota(jnp.int32, (n, c), 1)
        onehot = (col == tgt).astype(jnp.float32)            # (N, C)

        # Single fused max/exp/log/sum chain over both loss terms.
        x = logits_ref[...].astype(jnp.float32)              # (G, N, C)
        m = jnp.max(x, axis=-1, keepdims=True)                        # (G, N, 1)
        lse = m + jnp.log(jnp.sum(jnp.exp(x - m), axis=-1, keepdims=True))
        tgt_logit = jnp.sum(x * onehot[None, :, :], axis=-1, keepdims=True)
        # NaN-safe masking of ignored rows (jnp.where, not 0 * x).
        per = jnp.where(valid[None, :, :], lse - tgt_logit, 0.0)      # (G, N, 1)

        if has_aux:
            # weight the intermediate-loss group, then reduce everything once
            gidx = jax.lax.broadcasted_iota(jnp.int32, per.shape, 0)
            per = jnp.where(gidx == 0, per, per * weight)

        # Single exact division; scalar result through SMEM.
        out_ref[0, 0] = jnp.sum(per) / cnt

    return kernel


# --- wrapper ------------------------------------------------------------------
def ggnn_loss(predictions, targets, intermediate_predictions=None,
              has_aux_input=HAS_AUX_INPUT,
              intermediate_loss_weight=INTERMEDIATE_LOSS_WEIGHT):
    """loss = CE(pred, tgt) [+ w * CE(intermediate_pred, tgt)], ignore_index=-1."""
    n, _ = predictions.shape
    assert targets.shape[0] == n, "targets / predictions batch mismatch"
    tgt2d = targets.reshape(n, 1).astype(jnp.int32)

    if has_aux_input:
        assert intermediate_predictions is not None
        logits = jnp.stack([predictions, intermediate_predictions], axis=0)
    else:
        logits = predictions[None]

    vmem = pl.BlockSpec(memory_space=pltpu.MemorySpace.VMEM)
    smem = pl.BlockSpec(memory_space=pltpu.MemorySpace.SMEM)
    out = pl.pallas_call(
        _make_loss_kernel(has_aux_input, float(intermediate_loss_weight)),
        out_shape=jax.ShapeDtypeStruct((1, 1), jnp.float32),
        in_specs=[vmem, vmem],
        out_specs=smem,
    )(logits, tgt2d)
    return out[0, 0]


# --- pure-JAX reference (matches PyTorch CrossEntropyLoss semantics) -----------
def reference_loss(predictions, intermediate_predictions, targets):
    def ce(x, t):
        logp = jax.nn.log_softmax(x.astype(jnp.float32), axis=-1)
        valid = t != IGNORE_INDEX
        t_safe = jnp.where(valid, t, 0)
        nll = -jnp.take_along_axis(logp, t_safe[:, None], axis=-1)[:, 0]
        nll = jnp.where(valid, nll, 0.0)
        return jnp.sum(nll) / jnp.sum(valid.astype(jnp.float32))

    loss = ce(predictions, targets)
    if HAS_AUX_INPUT:
        loss = loss + INTERMEDIATE_LOSS_WEIGHT * ce(intermediate_predictions, targets)
    return loss


if __name__ == "__main__":
    key = jax.random.PRNGKey(0)
    k1, k2, k3 = jax.random.split(key, 3)

    predictions = jax.random.normal(k1, (BATCH, NUM_CLASSES), jnp.float32)
    intermediate_predictions = jax.random.normal(k2, (BATCH, NUM_CLASSES), jnp.float32)
    targets = jax.random.randint(k3, (BATCH,), 0, NUM_CLASSES, dtype=jnp.int32)
    targets = targets.at[2].set(IGNORE_INDEX)   # exercise ignore_index=-1

    loss = ggnn_loss(predictions, targets, intermediate_predictions)
    jax.block_until_ready(loss)

    ref = reference_loss(predictions, intermediate_predictions, targets)
    assert np.isfinite(float(loss))
    assert np.allclose(np.asarray(loss), np.asarray(ref), rtol=1e-5, atol=1e-6), \
        f"kernel {float(loss)} vs reference {float(ref)}"

    print("KERNEL_OK")
</pallas_src>

<mosaic_0001>
module attributes {stable_mosaic.version = 11 : i64} {
  func.func @kernel(%arg0: memref<2x8x4xf32, #tpu.memory_space<vmem>>, %arg1: memref<8x1xi32, #tpu.memory_space<vmem>>, %arg2: memref<1x1xf32, #tpu.memory_space<smem>>) attributes {dimension_semantics = [], scalar_prefetch = 0 : i64, scratch_operands = 0 : i64, tpu.core_type = #tpu.core_type<tc>} {
    %c0 = arith.constant 0 : index
    %c0_0 = arith.constant 0 : index
    %0 = vector.load %arg1[%c0, %c0_0] : memref<8x1xi32, #tpu.memory_space<vmem>>, vector<8x1xi32>
    %c-1_i32 = arith.constant -1 : i32
    %1 = vector.broadcast %c-1_i32 : i32 to vector<8x1xi32>
    %2 = arith.cmpi ne, %0, %1 : vector<8x1xi32>
    %3 = arith.extui %2 : vector<8x1xi1> to vector<8x1xi32>
    %4 = arith.sitofp %3 : vector<8x1xi32> to vector<8x1xf32>
    %5 = vector.shape_cast %4 : vector<8x1xf32> to vector<1x8x1xf32>
    %cst = arith.constant dense<0.000000e+00> : vector<1xf32>
    %6 = vector.multi_reduction <add>, %5, %cst [1, 2] : vector<1x8x1xf32> to vector<1xf32>
    %7 = vector.shape_cast %6 : vector<1xf32> to vector<1x1x1xf32>
    %8 = vector.extract %7[0, 0, 0] : f32 from vector<1x1x1xf32>
    %9 = tpu.iota {dimensions = array<i32: 1>} : vector<8x4xi32>
    %10 = vector.broadcast %0 : vector<8x1xi32> to vector<8x4xi32>
    %11 = arith.cmpi eq, %9, %10 : vector<8x4xi32>
    %12 = arith.extui %11 : vector<8x4xi1> to vector<8x4xi32>
    %13 = arith.sitofp %12 : vector<8x4xi32> to vector<8x4xf32>
    %c0_1 = arith.constant 0 : index
    %c0_2 = arith.constant 0 : index
    %c0_3 = arith.constant 0 : index
    %14 = vector.load %arg0[%c0_1, %c0_2, %c0_3] : memref<2x8x4xf32, #tpu.memory_space<vmem>>, vector<2x8x4xf32>
    %cst_4 = arith.constant dense<0xFF800000> : vector<2x8xf32>
    %15 = vector.multi_reduction <maximumf>, %14, %cst_4 [2] : vector<2x8x4xf32> to vector<2x8xf32>
    %16 = vector.shape_cast %15 : vector<2x8xf32> to vector<2x8x1xf32>
    %17 = vector.broadcast %16 : vector<2x8x1xf32> to vector<2x8x4xf32>
    %18 = arith.subf %14, %17 : vector<2x8x4xf32>
    %19 = math.exp %18 : vector<2x8x4xf32>
    %cst_5 = arith.constant dense<0.000000e+00> : vector<2x8xf32>
    %20 = vector.multi_reduction <add>, %19, %cst_5 [2] : vector<2x8x4xf32> to vector<2x8xf32>
    %21 = vector.shape_cast %20 : vector<2x8xf32> to vector<2x8x1xf32>
    %22 = math.log %21 : vector<2x8x1xf32>
    %23 = arith.addf %16, %22 : vector<2x8x1xf32>
    %24 = vector.shape_cast %13 : vector<8x4xf32> to vector<1x8x4xf32>
    %25 = vector.broadcast %24 : vector<1x8x4xf32> to vector<2x8x4xf32>
    %26 = arith.mulf %14, %25 : vector<2x8x4xf32>
    %cst_6 = arith.constant dense<0.000000e+00> : vector<2x8xf32>
    %27 = vector.multi_reduction <add>, %26, %cst_6 [2] : vector<2x8x4xf32> to vector<2x8xf32>
    %28 = vector.shape_cast %27 : vector<2x8xf32> to vector<2x8x1xf32>
    %29 = vector.shape_cast %2 : vector<8x1xi1> to vector<1x8x1xi1>
    %30 = arith.subf %23, %28 : vector<2x8x1xf32>
    %cst_7 = arith.constant 0.000000e+00 : f32
    %31 = vector.shape_cast %29 : vector<1x8x1xi1> to vector<1x8x1xi1>
    %32 = vector.broadcast %31 : vector<1x8x1xi1> to vector<2x8x1xi1>
    %33 = vector.broadcast %cst_7 : f32 to vector<2x8x1xf32>
    %34 = arith.select %32, %30, %33 : vector<2x8x1xi1>, vector<2x8x1xf32>
    %35 = tpu.iota {dimensions = array<i32: 0>} : vector<2x8x1xi32>
    %c0_i32 = arith.constant 0 : i32
    %36 = vector.broadcast %c0_i32 : i32 to vector<2x8x1xi32>
    %37 = arith.cmpi eq, %35, %36 : vector<2x8x1xi32>
    %cst_8 = arith.constant 2.000000e-01 : f32
    %38 = vector.broadcast %cst_8 : f32 to vector<2x8x1xf32>
    %39 = arith.mulf %34, %38 : vector<2x8x1xf32>
    %40 = arith.select %37, %34, %39 : vector<2x8x1xi1>, vector<2x8x1xf32>
    %41 = vector.shape_cast %40 : vector<2x8x1xf32> to vector<1x2x8x1xf32>
    %cst_9 = arith.constant dense<0.000000e+00> : vector<1xf32>
    %42 = vector.multi_reduction <add>, %41, %cst_9 [1, 2, 3] : vector<1x2x8x1xf32> to vector<1xf32>
    %43 = vector.shape_cast %42 : vector<1xf32> to vector<1x1x1x1xf32>
    %44 = vector.extract %43[0, 0, 0, 0] : f32 from vector<1x1x1x1xf32>
    %45 = arith.divf %44, %8 : f32
    %c0_10 = arith.constant 0 : index
    %c0_11 = arith.constant 0 : index
    %46 = memref.load %arg2[%c0_10, %c0_11] : memref<1x1xf32, #tpu.memory_space<smem>>
    memref.store %45, %arg2[%c0_10, %c0_11] : memref<1x1xf32, #tpu.memory_space<smem>>
    return
  }
}

</mosaic_0001>

<llo_original>
// kernel: tpu_custom_call.1
$region0: #{tpu_custom_call.1}
  #allocation0 [shape = 'u32[]', space=smem, size = 0x4, offset = 0x4, fixed_abs, tag = 'smem constant byte address 0x4 - core index']
  #allocation1 [shape = 'u32[144,128]{1,0:T(1,128)}', space=vmem, size = 0x12000, scoped, tag = 'internal scratch']
  %s0 = inlined_call_operand.vmem [shape: f32[2,8,4], index: 0, kind: input, shape index: {}]
  %s1 = inlined_call_operand.vmem [shape: s32[8,1], index: 1, kind: input, shape index: {}]
  %s2 = inlined_call_operand.hbm [shape: f32[1,1], index: 2, kind: output, shape index: {}]
  %s3 = sld [smem:[#allocation0]]
  $region18: #{tpu_custom_call.1} parent=0
    _
  %s5 = ssub.s32 1, %s3
  %s6 = scalar_select 0, %s5, %s3
  $region1: #{tpu_custom_call.1} parent=0
    #allocation2 [shape = 'u8[512]{0}', space=smem, size = 0x200, scoped, tag = 'output window, operand 0, single buffered']
    #allocation3 [shape = 's32[1]{0}', space=sflag, size = 0x4, scoped, tag = 'scoped memory for tpu_custom_call.1']
    %7 = vsyncpa [#allocation3], 0
    // Predicated region
    $region2: #{tpu_custom_call.1} parent=1 // pred_check
      _
    $region3: #{tpu_custom_call.1} parent=1 // pred_check_branch
      %9 = sbr.rel (0) target = $region5
    $region4: #{tpu_custom_call.1} parent=1 // pred_region
      _
    $region5: #{tpu_custom_call.1} parent=1 // pred_fallthru
      _
    // Predicated region
    $region6: #{tpu_custom_call.1} parent=1 // pred_check
      _
    $region7: #{tpu_custom_call.1} parent=1 // pred_check_branch
      %11 = sbr.rel (0) target = $region9
    $region8: #{tpu_custom_call.1} parent=1 // pred_region
      _
    $region9: #{tpu_custom_call.1} parent=1 // pred_fallthru
      _
    %v12 = vld [vmem:[%s1] sm:$0xff]
    %vm13 = vcmp.ne.s32.totalorder %v12, 4294967295
    %v14 = vsel %vm13, 1, 0
    %v15 = vcvt.s32.f32 %v14
    %vm16 = vcmask 7168
    %v17 = vsel %vm16, %v15, 0.0
    %18 = vadd.xlane.f32.xlu0 %v17
    %v19 = vpop.xlane.xlu0 %18
    %v20 = vrot.slane %v19, 4
    %v21 = vadd.f32 %v19, %v20
    %v22 = vrot.slane %v21, 2
    %v23 = vadd.f32 %v21, %v22
    %v24 = vrot.slane %v23, 1
    %v25 = vadd.f32 %v23, %v24
    %s26 = vtos %v25
    %v27 = vlaneseq
    %v28 = vand.u32 %v27, 127
    %29 = vset.pattern.permute.xlu0 0
    %30 = vperm.xlu0 %29, %v12
    %v31 = vpop.permute.xlu0 %30
    %vm32 = vcmp.eq.s32.totalorder %v28, %v31
    %v33 = vsel %vm32, 1, 0
    %v34 = vcvt.s32.f32 %v33
    %v35 = vld [vmem:[%s0] sm:$0xff]
    %v36 = vld [vmem:[%s0 + $0x8] sm:$0xff]
    %vm37 = vcmask 31744
    %v38 = vsel %vm37, %v35, -inf
    %39 = vmax.xlane.f32.xlu0 %v38
    %v40 = vpop.xlane.xlu0 %39
    %v41 = vsel %vm37, %v36, -inf
    %42 = vmax.xlane.f32.xlu0 %v41
    %v43 = vpop.xlane.xlu0 %42
    %v44 = vsub.f32 %v35, %v40
    %v45 = vsub.f32 %v36, %v43
    %v46 = vmul.f32 %v44, 1.442695
    %v47 = vpow.pop %v46
    %v48 = vmul.f32 %v45, 1.442695
    %v49 = vpow.pop %v48
    %v50 = vsel %vm37, %v47, 0.0
    %51 = vadd.xlane.f32.xlu0 %v50
    %v52 = vpop.xlane.xlu0 %51
    %v53 = vsel %vm37, %v49, 0.0
    %54 = vadd.xlane.f32.xlu0 %v53
    %v55 = vpop.xlane.xlu0 %54
    %v56 = vlog2.pop %v52
    %v57 = vmul.f32 %v56, 0.6931472
    %v58 = vlog2.pop %v55
    %v59 = vmul.f32 %v58, 0.6931472
    %v60 = vadd.f32 %v40, %v57
    %v61 = vadd.f32 %v43, %v59
    %v62 = vmul.f32 %v35, %v34
    %v63 = vmul.f32 %v36, %v34
    %v64 = vsel %vm37, %v62, 0.0
    %65 = vadd.xlane.f32.xlu0 %v64
    %v66 = vpop.xlane.xlu0 %65
    %v67 = vsel %vm37, %v63, 0.0
    %68 = vadd.xlane.f32.xlu0 %v67
    %v69 = vpop.xlane.xlu0 %68
    %v70 = vsub.f32 %v60, %v66
    %v71 = vsub.f32 %v61, %v69
    %vm72 = vcmp.eq.s32.totalorder %v14, 1
    %v73 = vsel %vm72, %v70, 0.0
    %v74 = vsel %vm72, %v71, 0.0
    %v75 = vmul.f32 %v73, 0.2
    %v76 = vmul.f32 %v74, 0.2
    %v77 = vsel 1, %v73, %v75
    %v78 = vsel 0, %v74, %v76
    %v79 = vsel %vm16, %v77, 0.0
    %v80 = vsel %vm16, %v78, 0.0
    %v81 = vadd.f32 %v79, %v80
    %82 = vadd.xlane.f32.xlu0 %v81
    %v83 = vpop.xlane.xlu0 %82
    %v84 = vrot.slane %v83, 4
    %v85 = vadd.f32 %v83, %v84
    %v86 = vrot.slane %v85, 2
    %v87 = vadd.f32 %v85, %v86
    %v88 = vrot.slane %v87, 1
    %v89 = vadd.f32 %v87, %v88
    %s90 = vtos %v89
    %v91 = vstv %s26
    %v92 = vrcp.pop %v91
    %s93 = vtos %v92
    %s94 = smul.f32 %s90, %s93
    %s95 = scalar_lea.smem [#allocation2], 0
    %96 = sst [smem:[%s95]] %s94
    // Predicated region
    $region10: #{tpu_custom_call.1} parent=1 // pred_check
      _
    $region11: #{tpu_custom_call.1} parent=1 // pred_check_branch
      %98 = sbr.rel (0) target = $region13
    $region12: #{tpu_custom_call.1} parent=1 // pred_region
      %s100 = ssub.s32 16, 16
      %101 = vsyncadd [#allocation3], %s100
      %104 = dma.smem_to_hbm [#allocation2], 16, %s2, [#allocation3]
    $region13: #{tpu_custom_call.1} parent=1 // pred_fallthru
      _
    // Predicated region
    $region14: #{tpu_custom_call.1} parent=1 // pred_check
      _
    $region15: #{tpu_custom_call.1} parent=1 // pred_check_branch
      %106 = sbr.rel (0) target = $region17
    $region16: #{tpu_custom_call.1} parent=1 // pred_region
      %107 = dma.done [#allocation3], 16
    $region17: #{tpu_custom_call.1} parent=1 // pred_fallthru
      _
    %108 = sfence
    %109 = vsyncpa [#allocation3], 1

</llo_original>
